<compile_context>
chip_gen: v7x
topology: tpu7x:2x2x1
jax: 0.10.0
libtpu: 0.0.40
codegen_flags: <defaults>
</compile_context>

<pallas_src>
import jax
import jax.numpy as jnp
from jax.experimental import pallas as pl
from jax.experimental.pallas import tpu as pltpu

# Fixed (deterministic) architecture choices — first candidate of each choice.
OP1 = "tanh"     # nn.LayerChoice([Tanh, Sigmoid, ReLU]) -> Tanh
ADD_VALUE = 0    # nn.ValueChoice([0, 1, 2])             -> 0
OP2 = "tanh"     # nn.LayerChoice([Tanh, Sigmoid, ReLU]) -> Tanh

_WIDE_LANES = 512                 # lane-dense last dim (multiple of 128)
_TARGET_BLOCK_BYTES = 2 << 20     # ~2 MiB per buffer (safe on v5e scoped VMEM)
_VMEM_LIMIT_BYTES = 32 << 20      # explicit scoped-VMEM budget for gridded path


def _apply_op(name, v):
    if name == "tanh":
        return jnp.tanh(v)
    if name == "sigmoid":
        return jax.nn.sigmoid(v)
    if name == "relu":
        return jnp.maximum(v, 0.0)
    raise ValueError(name)


def dummy_model_kernel(x_ref, o_ref):
    v = x_ref[...]
    v = _apply_op(OP1, v)                       # op1 (EUP)
    if ADD_VALUE == 0:
        # (v * 2 + 0) * 4 == v * 8, exactly (power-of-two scalings).
        v = v * 8.0
    else:
        v = v * 2.0 + float(ADD_VALUE)          # x*2; x += add
        v = v * 4.0                             # x*4
    v = _apply_op(OP2, v)                       # op2 (EUP)
    o_ref[...] = v


def _pallas_elementwise_2d(x2d):
    """Run the elementwise kernel on a lane-dense (rows, cols) f32 array."""
    rows, cols = x2d.shape
    n_elem = rows * cols
    itemsize = jnp.dtype(x2d.dtype).itemsize
    cost = pl.CostEstimate(
        flops=n_elem,                       # the *8
        transcendentals=2 * n_elem,         # two tanh per element
        bytes_accessed=2 * itemsize * n_elem,
    )

    total_bytes = n_elem * itemsize
    if total_bytes <= _TARGET_BLOCK_BYTES:
        # Tiny problem (e.g. the 8 KiB example): gridless whole-array call,
        # single VMEM block, no per-step pipeline bookkeeping. Wall time is
        # dominated by custom-call launch + two small DMAs; nothing to tune.
        return pl.pallas_call(
            dummy_model_kernel,
            out_shape=jax.ShapeDtypeStruct((rows, cols), x2d.dtype),
            in_specs=[pl.BlockSpec(memory_space=pltpu.MemorySpace.VMEM)],
            out_specs=pl.BlockSpec(memory_space=pltpu.MemorySpace.VMEM),
            cost_estimate=cost,
        )(x2d)

    # Real-size path: 1-D parallel row grid, lane-dense ~2 MiB blocks.
    tile_r = max(8, _TARGET_BLOCK_BYTES // (cols * itemsize))
    tile_r = min(tile_r, rows)
    tile_r = max(8, (tile_r // 8) * 8)          # sublane-aligned block rows
    grid = (pl.cdiv(rows, tile_r),)
    return pl.pallas_call(
        dummy_model_kernel,
        out_shape=jax.ShapeDtypeStruct((rows, cols), x2d.dtype),
        grid=grid,
        in_specs=[pl.BlockSpec((tile_r, cols), lambda i: (i, 0))],
        out_specs=pl.BlockSpec((tile_r, cols), lambda i: (i, 0)),
        compiler_params=pltpu.CompilerParams(
            dimension_semantics=("parallel",),   # megacore-shardable on v7x
            vmem_limit_bytes=_VMEM_LIMIT_BYTES,
        ),
        cost_estimate=cost,
    )(x2d)


@jax.jit
def dummy_model_forward(x):
    """x: float32 NCHW tensor. Returns a tensor of the same shape/dtype."""
    orig_shape = x.shape
    n_elem = x.size
    cols = _WIDE_LANES
    padded = pl.cdiv(n_elem, cols) * cols

    # Contiguous flatten (free under jit); pad to a lane-multiple if needed.
    flat = x.reshape(-1)
    if padded != n_elem:
        flat = jnp.pad(flat, (0, padded - n_elem))
    x2d = flat.reshape(padded // cols, cols)

    out2d = _pallas_elementwise_2d(x2d)

    out_flat = out2d.reshape(-1)
    if padded != n_elem:
        out_flat = out_flat[:n_elem]
    return out_flat.reshape(orig_shape)


def dummy_model_reference(x):
    v = _apply_op(OP1, x)
    v = v * 2.0
    v = v + float(ADD_VALUE)
    v = v * 4.0
    v = _apply_op(OP2, v)
    return v


if __name__ == "__main__":
    key = jax.random.PRNGKey(0)
    x = jax.random.normal(key, (2, 4, 16, 16), dtype=jnp.float32)  # NCHW

    out = dummy_model_forward(x)
    out = jax.block_until_ready(out)

    ref = dummy_model_reference(x)
    assert out.shape == x.shape and out.dtype == x.dtype
    assert jnp.allclose(out, ref, atol=1e-6, rtol=1e-6)

    print("KERNEL_OK")
</pallas_src>

<mosaic_0001>
module attributes {stable_mosaic.version = 11 : i64} {
  func.func @dummy_model_kernel(%arg0: memref<4x512xf32, #tpu.memory_space<vmem>>, %arg1: memref<4x512xf32, #tpu.memory_space<vmem>>) attributes {dimension_semantics = [], scalar_prefetch = 0 : i64, scratch_operands = 0 : i64, tpu.core_type = #tpu.core_type<tc>} {
    %c0 = arith.constant 0 : index
    %c0_0 = arith.constant 0 : index
    %0 = vector.load %arg0[%c0, %c0_0] : memref<4x512xf32, #tpu.memory_space<vmem>>, vector<4x512xf32>
    %1 = math.tanh %0 : vector<4x512xf32>
    %cst = arith.constant 8.000000e+00 : f32
    %2 = vector.broadcast %cst : f32 to vector<4x512xf32>
    %3 = arith.mulf %1, %2 : vector<4x512xf32>
    %4 = math.tanh %3 : vector<4x512xf32>
    %c0_1 = arith.constant 0 : index
    %c0_2 = arith.constant 0 : index
    %5 = vector.load %arg1[%c0_1, %c0_2] : memref<4x512xf32, #tpu.memory_space<vmem>>, vector<4x512xf32>
    tpu.vector_store %arg1[%c0_1, %c0_2], %4 {strides = array<i32>} : memref<4x512xf32, #tpu.memory_space<vmem>>, vector<4x512xf32>,
    return
  }
}

</mosaic_0001>

<llo_original>
// kernel: dummy_model_forward.1
$region0: #{dummy_model_forward.1}
  #allocation0 [shape = 'u32[]', space=smem, size = 0x4, offset = 0x4, fixed_abs, tag = 'smem constant byte address 0x4 - core index']
  #allocation1 [shape = 'u32[144,128]{1,0:T(1,128)}', space=vmem, size = 0x12000, scoped, tag = 'internal scratch']
  %s0 = inlined_call_operand.vmem [shape: f32[4,512], index: 0, kind: input, shape index: {}]
  %s1 = inlined_call_operand.vmem [shape: f32[4,512], index: 1, kind: output, shape index: {}]
  %s2 = sld [smem:[#allocation0]]
  $region14: #{dummy_model_forward.1} parent=0
    _
  %s4 = ssub.s32 1, %s2
  %s5 = scalar_select 0, %s4, %s2
  // Predicated region
  $region2: #{dummy_model_forward.1} parent=0 // pred_check
    _
  $region3: #{dummy_model_forward.1} parent=0 // pred_check_branch
    %7 = sbr.rel (0) target = $region5
  $region4: #{dummy_model_forward.1} parent=0 // pred_region
    _
  $region5: #{dummy_model_forward.1} parent=0 // pred_fallthru
    _
  %v8 = vld [vmem:[%s0] sm:$0xff]
  %v9 = vld [vmem:[%s0 + $0x8] sm:$0xff]
  %v10 = vtanh.pop %v8
  %v11 = vtanh.pop %v9
  %v12 = vmul.f32 %v10, 8.0
  %v13 = vmul.f32 %v11, 8.0
  %v14 = vtanh.pop %v12
  %v15 = vtanh.pop %v13
  %16 = vst [vmem:[%s1] sm:$0xff] %v14
  %17 = vst [vmem:[%s1 + $0x8] sm:$0xff] %v15
  // Predicated region
  $region6: #{dummy_model_forward.1} parent=0 // pred_check
    _
  $region7: #{dummy_model_forward.1} parent=0 // pred_check_branch
    %19 = sbr.rel (0) target = $region9
  $region8: #{dummy_model_forward.1} parent=0 // pred_region
    _
  $region9: #{dummy_model_forward.1} parent=0 // pred_fallthru
    _
  // Predicated region
  $region10: #{dummy_model_forward.1} parent=0 // pred_check
    _
  $region11: #{dummy_model_forward.1} parent=0 // pred_check_branch
    %21 = sbr.rel (0) target = $region13
  $region12: #{dummy_model_forward.1} parent=0 // pred_region
    _
  $region13: #{dummy_model_forward.1} parent=0 // pred_fallthru
    _

</llo_original>
